<compile_context>
chip_gen: v6e
topology: v6e:2x2x1
jax: 0.10.0
libtpu: 0.0.40
codegen_flags: <defaults>
</compile_context>

<pallas_src>
import jax
import jax.numpy as jnp
from jax.experimental import pallas as pl
from jax.experimental.pallas import tpu as pltpu


def _imputation_kernel_fused(x_ref, w_ref, b_ref, sel_ref, out_ref):
    # x_ref:   [TB, 2D]   features, [bio | clinical] lane-concatenated
    # w_ref:   [2D, 2D]   block-anti-diagonal fused weight (pre-transposed, x @ W)
    # b_ref:   [1, 2D]    fused bias [b_clinical_to_bio | b_bio_to_clinical]
    # sel_ref: [TB, 2]    int32 selectors [use_imp0, use_imp1]
    # out_ref: [TB, 2D]
    two_d = x_ref.shape[-1]
    d = two_d // 2

    x = x_ref[...]                                              # [TB, 2D]
    imp = jnp.dot(x, w_ref[...],
                  preferred_element_type=jnp.float32) + b_ref[...]
    imp = imp.astype(out_ref.dtype)                             # [TB, 2D] = [imp0 | imp1]

    sel = sel_ref[...]                                          # [TB, 2] int32
    use0 = sel[:, 0:1] != 0                                     # replace modality 0?
    use1 = sel[:, 1:2] != 0                                     # replace modality 1?

    out_ref[:, :d] = jnp.where(use0, imp[:, :d], x[:, :d])
    out_ref[:, d:] = jnp.where(use1, imp[:, d:], x[:, d:])


def _imputation_kernel_split(x_ref, wc2b_ref, bc2b_ref, wb2c_ref, bb2c_ref,
                             sel_ref, out_ref):
    # v5e-friendly path: two native [TB,D] @ [D,D] matmuls (D = 128 fills the MXU).
    d = wc2b_ref.shape[0]
    x0 = x_ref[:, :d]                                           # bio
    x1 = x_ref[:, d:]                                           # clinical

    imp0 = (jnp.dot(x1, wc2b_ref[...],
                    preferred_element_type=jnp.float32) + bc2b_ref[...]
            ).astype(out_ref.dtype)
    imp1 = (jnp.dot(x0, wb2c_ref[...],
                    preferred_element_type=jnp.float32) + bb2c_ref[...]
            ).astype(out_ref.dtype)

    sel = sel_ref[...]
    use0 = sel[:, 0:1] != 0
    use1 = sel[:, 1:2] != 0

    out_ref[:, :d] = jnp.where(use0, imp0, x0)
    out_ref[:, d:] = jnp.where(use1, imp1, x1)


def _round_up(x, m):
    return ((x + m - 1) // m) * m


def modality_imputation(modality_features, modality_mask,
                        w_bio_to_clinical, b_bio_to_clinical,
                        w_clinical_to_bio, b_clinical_to_bio,
                        *, block_b=1024, fuse_matmuls=True):
    """
    modality_features:  [B, 2, D] float
    modality_mask:      [B, 2]    int (1 = modality available)
    w_*:                [D, D]    nn.Linear(D, D).weight
    b_*:                [D]       nn.Linear(D, D).bias
    fuse_matmuls:       True for v6e/v7x (256-wide MXU), False for v5e.
    returns:            [B, 2, D] imputed features
    """
    B, M, D = modality_features.shape
    assert M == 2, "ModalityImputationNet assumes exactly 2 modalities"
    dtype = modality_features.dtype

    # ---- batch tile selection --------------------------------------------
    TB = min(block_b, B)
    if TB < B:
        TB = max(8, (TB // 8) * 8)                 # sublane-aligned partial tile
    elif B > 16:
        # One block would cover the whole batch -> split into >= 2 grid steps
        # so v7x megacore sharding keeps both TensorCores busy.
        TB = _round_up(pl.cdiv(B, 2), 8)
    grid = (pl.cdiv(B, TB),)

    # ---- zero-copy layout: [B, 2, D] -> [B, 2D], selectors precomputed ----
    x2d = modality_features.reshape(B, M * D)

    m = modality_mask.astype(jnp.int32)
    cond0 = jnp.logical_and(m[:, 0] == 0, m[:, 1] == 1)   # impute modality 0
    cond1 = jnp.logical_and(m[:, 0] == 1, m[:, 1] == 0)   # impute modality 1
    sel = jnp.stack([cond0, cond1], axis=1).astype(jnp.int32)     # [B, 2]

    # ---- compiler params: only raise scoped VMEM if the tile needs it -----
    itemsize = jnp.dtype(dtype).itemsize
    vmem_est = (4 * TB * 2 * D * itemsize          # in + out, double-buffered
                + 2 * TB * 2 * D * 4               # f32 matmul/select temporaries
                + 2 * (2 * D) * (2 * D) * itemsize)  # resident weights
    cp_kwargs = dict(dimension_semantics=("parallel",))
    if vmem_est > 14 * 1024 * 1024:                # beyond v5e's 16 MiB default
        cp_kwargs["vmem_limit_bytes"] = min(2 * vmem_est, 48 * 1024 * 1024)
    compiler_params = pltpu.CompilerParams(**cp_kwargs)

    if fuse_matmuls:
        # Block-anti-diagonal fused weight: [x0 | x1] @ W_big = [imp0 | imp1]
        #   cols 0:D   = x1 @ Wc2b^T + bc2b   (clinical_to_bio)
        #   cols D:2D  = x0 @ Wb2c^T + bb2c   (bio_to_clinical)
        w_big = jnp.zeros((2 * D, 2 * D), dtype=dtype)
        w_big = w_big.at[D:, :D].set(jnp.transpose(w_clinical_to_bio).astype(dtype))
        w_big = w_big.at[:D, D:].set(jnp.transpose(w_bio_to_clinical).astype(dtype))
        b_big = jnp.concatenate([b_clinical_to_bio, b_bio_to_clinical]
                                ).reshape(1, 2 * D).astype(dtype)

        out2d = pl.pallas_call(
            _imputation_kernel_fused,
            out_shape=jax.ShapeDtypeStruct((B, 2 * D), dtype),
            grid=grid,
            in_specs=[
                pl.BlockSpec((TB, 2 * D), lambda i: (i, 0)),      # features (tiled)
                pl.BlockSpec((2 * D, 2 * D), lambda i: (0, 0)),   # fused W (resident)
                pl.BlockSpec((1, 2 * D), lambda i: (0, 0)),       # fused bias
                pl.BlockSpec((TB, 2), lambda i: (i, 0)),          # selectors (tiled)
            ],
            out_specs=pl.BlockSpec((TB, 2 * D), lambda i: (i, 0)),
            compiler_params=compiler_params,
        )(x2d, w_big, b_big, sel)
    else:
        wc2b_t = jnp.transpose(w_clinical_to_bio).astype(dtype)   # [D_in, D_out]
        wb2c_t = jnp.transpose(w_bio_to_clinical).astype(dtype)
        bc2b = b_clinical_to_bio.reshape(1, D).astype(dtype)
        bb2c = b_bio_to_clinical.reshape(1, D).astype(dtype)

        out2d = pl.pallas_call(
            _imputation_kernel_split,
            out_shape=jax.ShapeDtypeStruct((B, 2 * D), dtype),
            grid=grid,
            in_specs=[
                pl.BlockSpec((TB, 2 * D), lambda i: (i, 0)),      # features (tiled)
                pl.BlockSpec((D, D), lambda i: (0, 0)),           # W clinical_to_bio^T
                pl.BlockSpec((1, D), lambda i: (0, 0)),           # b clinical_to_bio
                pl.BlockSpec((D, D), lambda i: (0, 0)),           # W bio_to_clinical^T
                pl.BlockSpec((1, D), lambda i: (0, 0)),           # b bio_to_clinical
                pl.BlockSpec((TB, 2), lambda i: (i, 0)),          # selectors (tiled)
            ],
            out_specs=pl.BlockSpec((TB, 2 * D), lambda i: (i, 0)),
            compiler_params=compiler_params,
        )(x2d, wc2b_t, bc2b, wb2c_t, bb2c, sel)

    return out2d.reshape(B, M, D)


if __name__ == "__main__":
    B, M, D = 8, 2, 128   # batch, num_modalities, fusion_dim (lane-dense D)

    key = jax.random.PRNGKey(0)
    k_x, k_w1, k_b1, k_w2, k_b2 = jax.random.split(key, 5)

    modality_features = jax.random.normal(k_x, (B, M, D), dtype=jnp.float32)
    # Rows cover: both present, bio missing, clinical missing, both missing (x2).
    modality_mask = jnp.array([[1, 1], [0, 1], [1, 0], [0, 0],
                               [0, 1], [1, 0], [1, 1], [0, 0]], dtype=jnp.int32)

    w_b2c = jax.random.normal(k_w1, (D, D), dtype=jnp.float32) * 0.05  # bio_to_clinical.weight
    b_b2c = jax.random.normal(k_b1, (D,), dtype=jnp.float32) * 0.05    # bio_to_clinical.bias
    w_c2b = jax.random.normal(k_w2, (D, D), dtype=jnp.float32) * 0.05  # clinical_to_bio.weight
    b_c2b = jax.random.normal(k_b2, (D,), dtype=jnp.float32) * 0.05    # clinical_to_bio.bias

    # Fused-MXU path (v6e / v7x default).
    out_fused = modality_imputation(modality_features, modality_mask,
                                    w_b2c, b_b2c, w_c2b, b_c2b,
                                    fuse_matmuls=True)
    # Split 128x128 path (v5e).
    out_split = modality_imputation(modality_features, modality_mask,
                                    w_b2c, b_b2c, w_c2b, b_c2b,
                                    fuse_matmuls=False)
    out_fused = jax.block_until_ready(out_fused)
    out_split = jax.block_until_ready(out_split)

    # Pure-JAX reference (matches the PyTorch per-sample loop semantics).
    hi = jax.lax.Precision.HIGHEST
    imp0 = jnp.dot(modality_features[:, 1, :], w_c2b.T, precision=hi) + b_c2b
    imp1 = jnp.dot(modality_features[:, 0, :], w_b2c.T, precision=hi) + b_b2c
    cond0 = (modality_mask[:, 0] == 0) & (modality_mask[:, 1] == 1)
    cond1 = (modality_mask[:, 0] == 1) & (modality_mask[:, 1] == 0)
    ref0 = jnp.where(cond0[:, None], imp0, modality_features[:, 0, :])
    ref1 = jnp.where(cond1[:, None], imp1, modality_features[:, 1, :])
    ref = jnp.stack([ref0, ref1], axis=1)

    assert out_fused.shape == (B, M, D)
    assert out_split.shape == (B, M, D)
    # f32 MXU path vs Precision.HIGHEST differs at ~1e-5 level; 1e-2 tolerance is ample.
    assert jnp.allclose(out_fused, ref, atol=1e-2, rtol=1e-2), "fused kernel mismatch"
    assert jnp.allclose(out_split, ref, atol=1e-2, rtol=1e-2), "split kernel mismatch"

    print("KERNEL_OK")
</pallas_src>

<mosaic_0001>
module attributes {stable_mosaic.version = 11 : i64} {
  func.func @_imputation_kernel_fused(%arg0: i32, %arg1: memref<8x256xf32, #tpu.memory_space<vmem>>, %arg2: memref<256x256xf32, #tpu.memory_space<vmem>>, %arg3: memref<1x256xf32, #tpu.memory_space<vmem>>, %arg4: memref<8x2xi32, #tpu.memory_space<vmem>>, %arg5: memref<8x256xf32, #tpu.memory_space<vmem>>) attributes {dimension_semantics = [#tpu.dimension_semantics<parallel>], iteration_bounds = array<i64: 1>, scalar_prefetch = 0 : i64, scratch_operands = 0 : i64, tpu.core_type = #tpu.core_type<tc>, window_params = [{transform_indices = @transform_0, window_bounds = array<i64: 8, 256>}, {pipeline_mode = #tpu.pipeline_mode<synchronous>, transform_indices = @transform_1, window_bounds = array<i64: 256, 256>}, {pipeline_mode = #tpu.pipeline_mode<synchronous>, transform_indices = @transform_2, window_bounds = array<i64: 1, 256>}, {transform_indices = @transform_3, window_bounds = array<i64: 8, 2>}, {transform_indices = @transform_4, window_bounds = array<i64: 8, 256>}]} {
    %c0 = arith.constant 0 : index
    %c0_0 = arith.constant 0 : index
    %0 = vector.load %arg1[%c0, %c0_0] : memref<8x256xf32, #tpu.memory_space<vmem>>, vector<8x256xf32>
    %c0_1 = arith.constant 0 : index
    %c0_2 = arith.constant 0 : index
    %1 = vector.load %arg2[%c0_1, %c0_2] : memref<256x256xf32, #tpu.memory_space<vmem>>, vector<256x256xf32>
    %cst = arith.constant dense<0.000000e+00> : vector<8x256xf32>
    %2 = tpu.matmul %0, %1, %cst {dimension_numbers = #tpu.dot_dimension_numbers<[1], [0], [0], [1], [0, 0, 1, 1], [], []>} : vector<8x256xf32>, vector<256x256xf32>, vector<8x256xf32> -> vector<8x256xf32>
    %c0_3 = arith.constant 0 : index
    %c0_4 = arith.constant 0 : index
    %3 = vector.load %arg3[%c0_3, %c0_4] : memref<1x256xf32, #tpu.memory_space<vmem>>, vector<1x256xf32>
    %4 = vector.broadcast %3 : vector<1x256xf32> to vector<8x256xf32>
    %5 = arith.addf %2, %4 : vector<8x256xf32>
    %c0_5 = arith.constant 0 : index
    %c0_6 = arith.constant 0 : index
    %6 = vector.load %arg4[%c0_5, %c0_6] : memref<8x2xi32, #tpu.memory_space<vmem>>, vector<8x2xi32>
    %7 = vector.extract_strided_slice %6 {offsets = [0, 0], sizes = [8, 1], strides = [1, 1]} : vector<8x2xi32> to vector<8x1xi32>
    %c0_i32 = arith.constant 0 : i32
    %8 = vector.broadcast %c0_i32 : i32 to vector<8x1xi32>
    %9 = arith.cmpi ne, %7, %8 : vector<8x1xi32>
    %10 = vector.extract_strided_slice %6 {offsets = [0, 1], sizes = [8, 1], strides = [1, 1]} : vector<8x2xi32> to vector<8x1xi32>
    %c0_i32_7 = arith.constant 0 : i32
    %11 = vector.broadcast %c0_i32_7 : i32 to vector<8x1xi32>
    %12 = arith.cmpi ne, %10, %11 : vector<8x1xi32>
    %13 = vector.extract_strided_slice %5 {offsets = [0, 0], sizes = [8, 128], strides = [1, 1]} : vector<8x256xf32> to vector<8x128xf32>
    %14 = vector.extract_strided_slice %0 {offsets = [0, 0], sizes = [8, 128], strides = [1, 1]} : vector<8x256xf32> to vector<8x128xf32>
    %15 = vector.shape_cast %9 : vector<8x1xi1> to vector<8x1xi1>
    %16 = vector.broadcast %15 : vector<8x1xi1> to vector<8x128xi1>
    %17 = arith.select %16, %13, %14 : vector<8x128xi1>, vector<8x128xf32>
    %c0_8 = arith.constant 0 : index
    %c0_9 = arith.constant 0 : index
    %18 = vector.load %arg5[%c0_8, %c0_9] : memref<8x256xf32, #tpu.memory_space<vmem>>, vector<8x128xf32>
    tpu.vector_store %arg5[%c0_8, %c0_9], %17 {strides = array<i32>} : memref<8x256xf32, #tpu.memory_space<vmem>>, vector<8x128xf32>,
    %19 = vector.extract_strided_slice %5 {offsets = [0, 128], sizes = [8, 128], strides = [1, 1]} : vector<8x256xf32> to vector<8x128xf32>
    %20 = vector.extract_strided_slice %0 {offsets = [0, 128], sizes = [8, 128], strides = [1, 1]} : vector<8x256xf32> to vector<8x128xf32>
    %21 = vector.shape_cast %12 : vector<8x1xi1> to vector<8x1xi1>
    %22 = vector.broadcast %21 : vector<8x1xi1> to vector<8x128xi1>
    %23 = arith.select %22, %19, %20 : vector<8x128xi1>, vector<8x128xf32>
    %c0_10 = arith.constant 0 : index
    %c128 = arith.constant 128 : index
    %24 = vector.load %arg5[%c0_10, %c128] : memref<8x256xf32, #tpu.memory_space<vmem>>, vector<8x128xf32>
    tpu.vector_store %arg5[%c0_10, %c128], %23 {strides = array<i32>} : memref<8x256xf32, #tpu.memory_space<vmem>>, vector<8x128xf32>,
    return
  }
  func.func @transform_0(%arg0: i32) -> (i32, i32) {
    %c0_i32 = arith.constant 0 : i32
    %c0_i32_0 = arith.constant 0 : i32
    return %arg0, %c0_i32 : i32, i32
  }
  func.func @transform_1(%arg0: i32) -> (i32, i32) {
    %c0_i32 = arith.constant 0 : i32
    %c0_i32_0 = arith.constant 0 : i32
    %c0_i32_1 = arith.constant 0 : i32
    return %c0_i32, %c0_i32_0 : i32, i32
  }
  func.func @transform_2(%arg0: i32) -> (i32, i32) {
    %c0_i32 = arith.constant 0 : i32
    %c0_i32_0 = arith.constant 0 : i32
    %c0_i32_1 = arith.constant 0 : i32
    return %c0_i32, %c0_i32_0 : i32, i32
  }
  func.func @transform_3(%arg0: i32) -> (i32, i32) {
    %c0_i32 = arith.constant 0 : i32
    %c0_i32_0 = arith.constant 0 : i32
    return %arg0, %c0_i32 : i32, i32
  }
  func.func @transform_4(%arg0: i32) -> (i32, i32) {
    %c0_i32 = arith.constant 0 : i32
    %c0_i32_0 = arith.constant 0 : i32
    return %arg0, %c0_i32 : i32, i32
  }
}

</mosaic_0001>

<llo_original>
// kernel: tpu_custom_call.1
$region0: #{tpu_custom_call.1}
  #allocation0 [shape = 'u32[]', space=smem, size = 0x4, offset = 0x4, fixed_abs, tag = 'smem constant byte address 0x4 - core index']
  #allocation1 [shape = 'u32[144,128]{1,0:T(1,128)}', space=vmem, size = 0x12000, scoped, tag = 'internal scratch']
  %s0 = inlined_call_operand.hbm [shape: f32[8,256], index: 0, kind: input, shape index: {}]
  %s1 = inlined_call_operand.hbm [shape: f32[256,256], index: 1, kind: input, shape index: {}]
  %s2 = inlined_call_operand.vmem [shape: f32[1,256], index: 2, kind: input, shape index: {}]
  %s3 = inlined_call_operand.vmem [shape: s32[8,2], index: 3, kind: input, shape index: {}]
  %s4 = inlined_call_operand.hbm [shape: f32[8,256], index: 4, kind: output, shape index: {}]
  %s5 = sld [smem:[#allocation0]]
  $region34: #{tpu_custom_call.1} parent=0
    _
  %s7 = ssub.s32 1, %s5
  %s8 = scalar_select 0, %s7, %s5
  $region1: #{tpu_custom_call.1} parent=0
    #allocation2 [shape = 'u8[8192]{0}', space=vmem, size = 0x2000, scoped, tag = 'input window, operand 0, single buffered']
    #allocation3 [shape = 's32[1]{0}', space=sflag, size = 0x4, scoped, tag = 'scoped memory for tpu_custom_call.1']
    #allocation4 [shape = 's32[1]{0}', space=sflag, size = 0x4, scoped, tag = 'scoped memory for tpu_custom_call.1']
    #allocation5 [shape = 'u8[262144]{0}', space=vmem, size = 0x40000, scoped, tag = 'input window, operand 1, single buffered']
    #allocation6 [shape = 's32[1]{0}', space=sflag, size = 0x4, scoped, tag = 'scoped memory for tpu_custom_call.1']
    #allocation7 [shape = 'u8[8192]{0}', space=vmem, size = 0x2000, scoped, tag = 'output window, operand 0, single buffered']
    %9 = vsyncpa [#allocation3], 0
    %10 = vsyncpa [#allocation6], 0
    %11 = vsyncpa [#allocation4], 0
    // Predicated region
    $region2: #{tpu_custom_call.1} parent=1 // pred_check
      _
    $region3: #{tpu_custom_call.1} parent=1 // pred_check_branch
      %13 = sbr.rel (0) target = $region5
    $region4: #{tpu_custom_call.1} parent=1 // pred_region
      %s15 = ssub.s32 256, 256
      %16 = vsyncadd [#allocation3], %s15
      %s18 = sshll.u32 [#allocation2], 4
      %s19 = int_to_ptr.vmem [resolvable:$true] %s18
      %21 = dma.hbm_to_vmem [thread:$0]  %s0, 256, %s19, [#allocation3]
    $region5: #{tpu_custom_call.1} parent=1 // pred_fallthru
      _
    // Predicated region
    $region6: #{tpu_custom_call.1} parent=1 // pred_check
      _
    $region7: #{tpu_custom_call.1} parent=1 // pred_check_branch
      %23 = sbr.rel (0) target = $region9
    $region8: #{tpu_custom_call.1} parent=1 // pred_region
      %s25 = ssub.s32 8192, 8192
      %26 = vsyncadd [#allocation6], %s25
      %s27 = sshll.u32 [#allocation5], 4
      %s28 = int_to_ptr.vmem [resolvable:$true] %s27
      %33 = dma.hbm_to_vmem [thread:$0]  %s1, 8192, %s28, [#allocation6], 256, 256, 16
    $region9: #{tpu_custom_call.1} parent=1 // pred_fallthru
      _
    // Predicated region
    $region10: #{tpu_custom_call.1} parent=1 // pred_check
      _
    $region11: #{tpu_custom_call.1} parent=1 // pred_check_branch
      %35 = sbr.rel (0) target = $region13
    $region12: #{tpu_custom_call.1} parent=1 // pred_region
      _
    $region13: #{tpu_custom_call.1} parent=1 // pred_fallthru
      _
    // Predicated region
    $region14: #{tpu_custom_call.1} parent=1 // pred_check
      _
    $region15: #{tpu_custom_call.1} parent=1 // pred_check_branch
      %37 = sbr.rel (0) target = $region17
    $region16: #{tpu_custom_call.1} parent=1 // pred_region
      _
    $region17: #{tpu_custom_call.1} parent=1 // pred_fallthru
      _
    // Predicated region
    $region18: #{tpu_custom_call.1} parent=1 // pred_check
      _
    $region19: #{tpu_custom_call.1} parent=1 // pred_check_branch
      %39 = sbr.rel (0) target = $region21
    $region20: #{tpu_custom_call.1} parent=1 // pred_region
      %40 = dma.done [#allocation3], 256
    $region21: #{tpu_custom_call.1} parent=1 // pred_fallthru
      _
    // Predicated region
    $region22: #{tpu_custom_call.1} parent=1 // pred_check
      _
    $region23: #{tpu_custom_call.1} parent=1 // pred_check_branch
      %42 = sbr.rel (0) target = $region25
    $region24: #{tpu_custom_call.1} parent=1 // pred_region
      %43 = dma.done [#allocation6], 8192
    $region25: #{tpu_custom_call.1} parent=1 // pred_fallthru
      _
    %v44 = vld [vmem:[#allocation2] sm:$0xff]
    %v45 = vld [vmem:[#allocation2 + $0x8] sm:$0xff]
    %v46 = vld [vmem:[#allocation5] sm:$0xff]
    %v47 = vld [vmem:[#allocation5 + $0x8] sm:$0xff]
    %v48 = vld [vmem:[#allocation5 + $0x10] sm:$0xff]
    %v49 = vld [vmem:[#allocation5 + $0x18] sm:$0xff]
    %v50 = vld [vmem:[#allocation5 + $0x20] sm:$0xff]
    %v51 = vld [vmem:[#allocation5 + $0x28] sm:$0xff]
    %v52 = vld [vmem:[#allocation5 + $0x30] sm:$0xff]
    %v53 = vld [vmem:[#allocation5 + $0x38] sm:$0xff]
    %v54 = vld [vmem:[#allocation5 + $0x40] sm:$0xff]
    %v55 = vld [vmem:[#allocation5 + $0x48] sm:$0xff]
    %v56 = vld [vmem:[#allocation5 + $0x50] sm:$0xff]
    %v57 = vld [vmem:[#allocation5 + $0x58] sm:$0xff]
    %v58 = vld [vmem:[#allocation5 + $0x60] sm:$0xff]
    %v59 = vld [vmem:[#allocation5 + $0x68] sm:$0xff]
    %v60 = vld [vmem:[#allocation5 + $0x70] sm:$0xff]
    %v61 = vld [vmem:[#allocation5 + $0x78] sm:$0xff]
    %v62 = vld [vmem:[#allocation5 + $0x80] sm:$0xff]
    %v63 = vld [vmem:[#allocation5 + $0x88] sm:$0xff]
    %v64 = vld [vmem:[#allocation5 + $0x90] sm:$0xff]
    %v65 = vld [vmem:[#allocation5 + $0x98] sm:$0xff]
    %v66 = vld [vmem:[#allocation5 + $0xa0] sm:$0xff]
    %v67 = vld [vmem:[#allocation5 + $0xa8] sm:$0xff]
    %v68 = vld [vmem:[#allocation5 + $0xb0] sm:$0xff]
    %v69 = vld [vmem:[#allocation5 + $0xb8] sm:$0xff]
    %v70 = vld [vmem:[#allocation5 + $0xc0] sm:$0xff]
    %v71 = vld [vmem:[#allocation5 + $0xc8] sm:$0xff]
    %v72 = vld [vmem:[#allocation5 + $0xd0] sm:$0xff]
    %v73 = vld [vmem:[#allocation5 + $0xd8] sm:$0xff]
    %v74 = vld [vmem:[#allocation5 + $0xe0] sm:$0xff]
    %v75 = vld [vmem:[#allocation5 + $0xe8] sm:$0xff]
    %v76 = vld [vmem:[#allocation5 + $0xf0] sm:$0xff]
    %v77 = vld [vmem:[#allocation5 + $0xf8] sm:$0xff]
    %v78 = vld [vmem:[#allocation5 + $0x100] sm:$0xff]
    %v79 = vld [vmem:[#allocation5 + $0x108] sm:$0xff]
    %v80 = vld [vmem:[#allocation5 + $0x110] sm:$0xff]
    %v81 = vld [vmem:[#allocation5 + $0x118] sm:$0xff]
    %v82 = vld [vmem:[#allocation5 + $0x120] sm:$0xff]
    %v83 = vld [vmem:[#allocation5 + $0x128] sm:$0xff]
    %v84 = vld [vmem:[#allocation5 + $0x130] sm:$0xff]
    %v85 = vld [vmem:[#allocation5 + $0x138] sm:$0xff]
    %v86 = vld [vmem:[#allocation5 + $0x140] sm:$0xff]
    %v87 = vld [vmem:[#allocation5 + $0x148] sm:$0xff]
    %v88 = vld [vmem:[#allocation5 + $0x150] sm:$0xff]
    %v89 = vld [vmem:[#allocation5 + $0x158] sm:$0xff]
    %v90 = vld [vmem:[#allocation5 + $0x160] sm:$0xff]
    %v91 = vld [vmem:[#allocation5 + $0x168] sm:$0xff]
    %v92 = vld [vmem:[#allocation5 + $0x170] sm:$0xff]
    %v93 = vld [vmem:[#allocation5 + $0x178] sm:$0xff]
    %v94 = vld [vmem:[#allocation5 + $0x180] sm:$0xff]
    %v95 = vld [vmem:[#allocation5 + $0x188] sm:$0xff]
    %v96 = vld [vmem:[#allocation5 + $0x190] sm:$0xff]
    %v97 = vld [vmem:[#allocation5 + $0x198] sm:$0xff]
    %v98 = vld [vmem:[#allocation5 + $0x1a0] sm:$0xff]
    %v99 = vld [vmem:[#allocation5 + $0x1a8] sm:$0xff]
    %v100 = vld [vmem:[#allocation5 + $0x1b0] sm:$0xff]
    %v101 = vld [vmem:[#allocation5 + $0x1b8] sm:$0xff]
    %v102 = vld [vmem:[#allocation5 + $0x1c0] sm:$0xff]
    %v103 = vld [vmem:[#allocation5 + $0x1c8] sm:$0xff]
    %v104 = vld [vmem:[#allocation5 + $0x1d0] sm:$0xff]
    %v105 = vld [vmem:[#allocation5 + $0x1d8] sm:$0xff]
    %v106 = vld [vmem:[#allocation5 + $0x1e0] sm:$0xff]
    %v107 = vld [vmem:[#allocation5 + $0x1e8] sm:$0xff]
    %v108 = vld [vmem:[#allocation5 + $0x1f0] sm:$0xff]
    %v109 = vld [vmem:[#allocation5 + $0x1f8] sm:$0xff]
    %v110 = vld [vmem:[%s2] sm:$0x3]
    %v112 = vlaneseq
    %v113 = vshrl.u32 %v112, 7
    %v114 = vsub.s32 0, %v113
    %v115 = vrot.slane %v110, %v114
    %v116 = vlaneseq
    %v117 = vshrl.u32 %v116, 7
    %v118 = vsub.s32 1, %v117
    %v119 = vrot.slane %v110, %v118
    %122 = vmatprep.subr.mxu0 %v77
    %123 = vmatpush1.msra.mxu0 %v76
    %124 = vmatprep.subr.mxu0 %v75
    %125 = vmatpush1.msra.mxu0 %v74
    %126 = vmatprep.subr.mxu0 %v73
    %127 = vmatpush1.msra.mxu0 %v72
    %128 = vmatprep.subr.mxu0 %v71
    %129 = vmatpush1.msra.mxu0 %v70
    %130 = vmatprep.subr.mxu0 %v69
    %131 = vmatpush1.msra.mxu0 %v68
    %132 = vmatprep.subr.mxu0 %v67
    %133 = vmatpush1.msra.mxu0 %v66
    %134 = vmatprep.subr.mxu0 %v65
    %135 = vmatpush1.msra.mxu0 %v64
    %136 = vmatprep.subr.mxu0 %v63
    %137 = vmatpush1.msra.mxu0 %v62
    %138 = vmatprep.subr.mxu0 %v61
    %139 = vmatpush1.msra.mxu0 %v60
    %140 = vmatprep.subr.mxu0 %v59
    %141 = vmatpush1.msra.mxu0 %v58
    %142 = vmatprep.subr.mxu0 %v57
    %143 = vmatpush1.msra.mxu0 %v56
    %144 = vmatprep.subr.mxu0 %v55
    %145 = vmatpush1.msra.mxu0 %v54
    %146 = vmatprep.subr.mxu0 %v53
    %147 = vmatpush1.msra.mxu0 %v52
    %148 = vmatprep.subr.mxu0 %v51
    %149 = vmatpush1.msra.mxu0 %v50
    %150 = vmatprep.subr.mxu0 %v49
    %151 = vmatpush1.msra.mxu0 %v48
    %152 = vmatprep.subr.mxu0 %v47
    %153 = vmatpush1.msra.mxu0 %v46
    %154 = vmatprep.subr.mxu0 %v109
    %155 = vmatpush2.msra.mxu0 %v108
    %156 = vmatprep.subr.mxu0 %v107
    %157 = vmatpush2.msra.mxu0 %v106
    %158 = vmatprep.subr.mxu0 %v105
    %159 = vmatpush2.msra.mxu0 %v104
    %160 = vmatprep.subr.mxu0 %v103
    %161 = vmatpush2.msra.mxu0 %v102
    %162 = vmatprep.subr.mxu0 %v101
    %163 = vmatpush2.msra.mxu0 %v100
    %164 = vmatprep.subr.mxu0 %v99
    %165 = vmatpush2.msra.mxu0 %v98
    %166 = vmatprep.subr.mxu0 %v97
    %167 = vmatpush2.msra.mxu0 %v96
    %168 = vmatprep.subr.mxu0 %v95
    %169 = vmatpush2.msra.mxu0 %v94
    %170 = vmatprep.subr.mxu0 %v93
    %171 = vmatpush2.msra.mxu0 %v92
    %172 = vmatprep.subr.mxu0 %v91
    %173 = vmatpush2.msra.mxu0 %v90
    %174 = vmatprep.subr.mxu0 %v89
    %175 = vmatpush2.msra.mxu0 %v88
    %176 = vmatprep.subr.mxu0 %v87
    %177 = vmatpush2.msra.mxu0 %v86
    %178 = vmatprep.subr.mxu0 %v85
    %179 = vmatpush2.msra.mxu0 %v84
    %180 = vmatprep.subr.mxu0 %v83
    %181 = vmatpush2.msra.mxu0 %v82
    %182 = vmatprep.subr.mxu0 %v81
    %183 = vmatpush2.msra.mxu0 %v80
    %184 = vmatprep.subr.mxu0 %v79
    %185 = vmatpush2.msra.mxu0 %v78
    %186 = vmatprep.mubr.f32.mxu0 %v45
    %187 = vmatmul.mubr.f32.gmra.mxu0 %v44
    %v188 = vpop.f32.mrf.mxu0
    %v189 = vadd.f32 %v115, %v188
    %v190 = vpop.f32.mrf.mxu0
    %v191 = vadd.f32 %v119, %v190
    %192 = vdwg.mxu0
    %v193 = vld [vmem:[%s3] sm:$0xff]
    %vm194 = vcmp.ne.s32.totalorder %v193, 0
    %v195 = vsel %vm194, 1, 0
    %196 = vset.pattern.permute.xlu0 0
    %197 = vperm.xlu0 %196, %v195
    %v198 = vpop.permute.xlu0 %197
    %vm199 = vcmp.eq.s32.totalorder %v198, 1
    %v200 = vsel %vm199, %v189, %v44
    %201 = vst [vmem:[#allocation7] sm:$0xff] %v200
    %202 = vset.pattern.permute.xlu0 1
    %203 = vperm.xlu0 %202, %v195
    %v204 = vpop.permute.xlu0 %203
    %vm205 = vcmp.eq.s32.totalorder %v204, 1
    %v206 = vsel %vm205, %v191, %v45
    %207 = vst [vmem:[#allocation7 + $0x8] sm:$0xff] %v206
    // Predicated region
    $region26: #{tpu_custom_call.1} parent=1 // pred_check
      _
    $region27: #{tpu_custom_call.1} parent=1 // pred_check_branch
      %209 = sbr.rel (0) target = $region29
    $region28: #{tpu_custom_call.1} parent=1 // pred_region
      %s211 = ssub.s32 256, 256
      %212 = vsyncadd [#allocation4], %s211
      %s214 = sshll.u32 [#allocation7], 4
      %s215 = int_to_ptr.vmem [resolvable:$true] %s214
      %217 = dma.vmem_to_hbm [thread:$0]  %s215, 256, %s4, [#allocation4]
    $region29: #{tpu_custom_call.1} parent=1 // pred_fallthru
      _
    // Predicated region
    $region30: #{tpu_custom_call.1} parent=1 // pred_check
      _
    $region31: #{tpu_custom_call.1} parent=1 // pred_check_branch
      %219 = sbr.rel (0) target = $region33
    $region32: #{tpu_custom_call.1} parent=1 // pred_region
      %220 = dma.done [#allocation4], 256
    $region33: #{tpu_custom_call.1} parent=1 // pred_fallthru
      _
    %221 = vsyncpa [#allocation3], 1
    %222 = vsyncpa [#allocation6], 1
    %223 = vsyncpa [#allocation4], 1

</llo_original>
